<compile_context>
chip_gen: v5e
topology: v5e:2x2
jax: 0.10.0
libtpu: 0.0.40
codegen_flags: <defaults>
</compile_context>

<pallas_src>
import functools

import jax
import jax.numpy as jnp
from jax.experimental import pallas as pl
from jax.experimental.pallas import tpu as pltpu


def _round_up(a, m):
    return ((a + m - 1) // m) * m


def _cdiv(a, m):
    return (a + m - 1) // m


def _vmem_budget_bytes():
    """~75% of per-core VMEM: ~48 MiB on v7x (64 MiB), ~96 MiB on v5e/v6e (128 MiB)."""
    cap = 64 << 20  # conservative fallback = v7x per-TensorCore VMEM
    try:
        info = pltpu.get_tpu_info()
        cap_q = int(getattr(info, "vmem_capacity_bytes", 0) or 0)
        if cap_q > 0:
            cap = cap_q
    except Exception:
        pass
    return (cap * 3) // 4


def encoder_block_kernel(seed_ref, x_ref, w_ref, b_ref, o_ref, *,
                         negative_slope, drop_rate, training):
    # Linear: y = x @ W + b   (W already (in_dim, out_dim_padded), lane-dense).
    x = x_ref[...]
    w = w_ref[...]
    if x.dtype != w.dtype:
        x = x.astype(w.dtype)          # in-kernel cast: no wrapper-side copy of x
    y = jnp.dot(x, w, preferred_element_type=jnp.float32)
    y = y + b_ref[...].astype(jnp.float32)

    # LeakyReLU(negative_slope=0.2) -- epilogue kept in f32.
    y = jnp.where(y > 0, y, jnp.float32(negative_slope) * y)

    # Dropout (inverted-dropout scaling, like torch.nn.Dropout in training mode).
    if training and drop_rate > 0.0:
        if drop_rate >= 1.0:
            y = jnp.zeros_like(y)
        else:
            tm, tn = y.shape
            # Stateless counter-based hash of (seed, global row, global col):
            # tiling-invariant stream.  Row/col contributions are built as a
            # (tm,1) and a (1,tn) vector and combined with one broadcast add.
            row0 = (pl.program_id(1) * tm).astype(jnp.uint32)
            col0 = (pl.program_id(0) * tn).astype(jnp.uint32)
            rows = jax.lax.broadcasted_iota(jnp.int32, (tm, 1), 0).astype(jnp.uint32) + row0
            cols = jax.lax.broadcasted_iota(jnp.int32, (1, tn), 1).astype(jnp.uint32) + col0
            seed_term = seed_ref[0].astype(jnp.uint32) * jnp.uint32(0xC2B2AE3D)
            h = rows * jnp.uint32(0x9E3779B1) + (cols * jnp.uint32(0x85EBCA77) + seed_term)
            # murmur3-style finalizer (plain VPU integer ops).
            h = h ^ (h >> jnp.uint32(16))
            h = h * jnp.uint32(0x85EBCA6B)
            h = h ^ (h >> jnp.uint32(13))
            h = h * jnp.uint32(0xC2B2AE35)
            h = h ^ (h >> jnp.uint32(16))
            # Integer-domain keep decision: P(keep) = 1 - drop_rate.
            threshold = jnp.uint32(min(int(round(drop_rate * 4294967296.0)), 0xFFFFFFFF))
            keep = h >= threshold
            scale = jnp.float32(1.0 / (1.0 - drop_rate))
            y = jnp.where(keep, y * scale, jnp.float32(0.0))

    o_ref[...] = y.astype(o_ref.dtype)


def prepare_encoder_params(w, b, *, compute_dtype=jnp.bfloat16):
    """Pad/cast the Linear parameters ONCE (cache the result; not per-call).

    w: (in_dim, out_dim)  -- transpose of torch.nn.Linear.weight
    b: (out_dim,)
    out_dim is zero-padded to a multiple of 128 lanes so every kernel output
    store is lane-dense.
    """
    K, N = w.shape
    assert b.shape == (N,)
    Np = _round_up(N, 128)
    w_p = jnp.zeros((K, Np), compute_dtype).at[:, :N].set(w.astype(compute_dtype))
    b_p = jnp.zeros((1, Np), jnp.float32).at[:, :N].set(b.astype(jnp.float32))
    return w_p, b_p, N


def encoder_block(x, params, seed, *, drop_rate=0.0, training=False,
                  negative_slope=0.2, out_dtype=None, tm_cap=1024):
    """EncoderBlock forward (Linear -> LeakyReLU(0.2) -> Dropout) via one pallas_call.

    x: (B, in_dim); params: from prepare_encoder_params(); seed: int dropout seed.
    """
    w_p, b_p, N = params
    B, K = x.shape
    Kw, Np = w_p.shape
    assert Kw == K and b_p.shape == (1, Np)
    if out_dtype is None:
        out_dtype = x.dtype

    x_bytes = jnp.dtype(x.dtype).itemsize
    w_bytes = jnp.dtype(w_p.dtype).itemsize
    o_bytes = jnp.dtype(out_dtype).itemsize
    budget = _vmem_budget_bytes()

    # --- column (out_dim) tile --------------------------------------------
    # Prefer tn = Np (one column tile): the weight block index is then constant
    # across the whole grid, so Pallas fetches it once and it stays resident.
    if 2 * K * Np * w_bytes <= max(budget // 3, 4 << 20):
        tn = Np
    else:
        tn = 512                                   # multiple of 256 (v6e/v7x MXU)
        while tn > 128 and 2 * K * tn * w_bytes > budget // 3:
            tn //= 2

    # --- row (batch) tile ----------------------------------------------------
    tm = min(tm_cap, _round_up(B, 16))             # 16: bf16 sublane packing
    if B >= 32:
        # >= 2 row tiles so v7x's two TensorCores both get work.
        tm = min(tm, _round_up(_cdiv(B, 2), 16))

    def footprint(tm_):
        fp = 2 * tm_ * K * x_bytes          # x tiles (double-buffered)
        fp += 2 * K * tn * w_bytes          # weight tiles
        fp += 2 * tn * 4                    # bias tiles
        fp += 2 * tm_ * tn * o_bytes        # output tiles
        fp += 2 * tm_ * tn * 4              # f32 epilogue + u32 dropout temporaries
        return fp

    while tm > 16 and footprint(tm) > budget:
        tm = max(16, _round_up(tm // 2, 16))

    n_rows = _cdiv(B, tm)
    n_cols = _cdiv(Np, tn)
    vmem_limit = int(min(budget, max(footprint(tm) + (8 << 20), 32 << 20)))

    seed_arr = jnp.asarray(seed, dtype=jnp.int32).reshape((1,))

    kern = functools.partial(
        encoder_block_kernel,
        negative_slope=float(negative_slope),
        drop_rate=float(drop_rate),
        training=bool(training),
    )

    # Grid: column tiles OUTER, row tiles INNER -> the (K, tn) weight block
    # index never changes inside the inner loop (no per-row-tile re-streaming).
    out = pl.pallas_call(
        kern,
        out_shape=jax.ShapeDtypeStruct((B, Np), out_dtype),
        grid_spec=pltpu.PrefetchScalarGridSpec(
            num_scalar_prefetch=1,
            grid=(n_cols, n_rows),
            in_specs=[
                pl.BlockSpec((tm, K), lambda j, i, s: (i, 0)),
                pl.BlockSpec((K, tn), lambda j, i, s: (0, j)),
                pl.BlockSpec((1, tn), lambda j, i, s: (0, j)),
            ],
            out_specs=pl.BlockSpec((tm, tn), lambda j, i, s: (i, j)),
        ),
        compiler_params=pltpu.CompilerParams(
            dimension_semantics=("parallel", "parallel"),
            vmem_limit_bytes=vmem_limit,
        ),
    )(seed_arr, x, w_p, b_p)

    return out if Np == N else out[:, :N]


if __name__ == "__main__":
    # Small shapes consistent with the module: batch=8, in_dim=32, out_dim=16.
    B, in_dim, out_dim = 8, 32, 16
    do_rates = 0.5

    key = jax.random.PRNGKey(0)
    kx, kw, kb = jax.random.split(key, 3)

    # nn.Linear default init: U(-1/sqrt(in_dim), 1/sqrt(in_dim)).
    bound = 1.0 / (in_dim ** 0.5)
    # PyTorch weight is (out_dim, in_dim); we hold its transpose (in_dim, out_dim).
    w = jax.random.uniform(kw, (in_dim, out_dim), jnp.float32, -bound, bound)
    b = jax.random.uniform(kb, (out_dim,), jnp.float32, -bound, bound)
    x = jax.random.normal(kx, (B, in_dim), jnp.float32)

    # Pure-JAX reference (eval mode: dropout is identity).
    y_lin = x @ w + b[None, :]
    y_ref = jnp.where(y_lin > 0, y_lin, 0.2 * y_lin)

    # Parameters are padded / cast ONCE here, outside the per-call path.
    params_f32 = prepare_encoder_params(w, b, compute_dtype=jnp.float32)
    params_bf16 = prepare_encoder_params(w, b, compute_dtype=jnp.bfloat16)

    # 1) Eval-mode, f32 compute path: tight check vs reference.
    y_f32 = jax.block_until_ready(
        encoder_block(x, params_f32, seed=0, drop_rate=do_rates, training=False))
    assert y_f32.shape == (B, out_dim)
    assert jnp.allclose(y_f32, y_ref, atol=1e-5, rtol=1e-5), "f32 eval mismatch"

    # 2) Eval-mode, default bf16 MXU path: looser tolerance.
    y_bf = jax.block_until_ready(
        encoder_block(x, params_bf16, seed=0, drop_rate=do_rates, training=False))
    assert jnp.allclose(y_bf, y_ref, atol=3e-2, rtol=3e-2), "bf16 eval mismatch"

    # 3) Training-mode dropout path (stochastic; RNG stream differs from torch,
    #    semantics — drop w.p. p, scale kept values by 1/(1-p) — match).
    y_tr = jax.block_until_ready(
        encoder_block(x, params_bf16, seed=1234, drop_rate=do_rates, training=True))
    assert y_tr.shape == (B, out_dim)
    dropped = (y_tr == 0)
    frac = float(jnp.mean(dropped.astype(jnp.float32)))
    assert 0.15 < frac < 0.85, f"dropout fraction {frac} implausible for p=0.5"
    kept_ok = jnp.where(dropped, True,
                        jnp.isclose(y_tr, y_bf / (1.0 - do_rates), atol=3e-2, rtol=3e-2))
    assert bool(jnp.all(kept_ok)), "kept values not scaled by 1/(1-p)"

    print("KERNEL_OK")
</pallas_src>

<mosaic_0001>
module attributes {stable_mosaic.version = 11 : i64} {
  func.func @encoder_block_kernel(%arg0: i32, %arg1: i32, %arg2: memref<1xi32, #tpu.memory_space<smem>>, %arg3: memref<16x32xf32, #tpu.memory_space<vmem>>, %arg4: memref<32x128xf32, #tpu.memory_space<vmem>>, %arg5: memref<1x128xf32, #tpu.memory_space<vmem>>, %arg6: memref<16x128xf32, #tpu.memory_space<vmem>>) attributes {dimension_semantics = [#tpu.dimension_semantics<parallel>, #tpu.dimension_semantics<parallel>], iteration_bounds = array<i64: 1, 1>, scalar_prefetch = 1 : i64, scratch_operands = 0 : i64, tpu.core_type = #tpu.core_type<tc>, window_params = [{transform_indices = @transform_0, window_bounds = array<i64: 16, 32>}, {transform_indices = @transform_1, window_bounds = array<i64: 32, 128>}, {transform_indices = @transform_2, window_bounds = array<i64: 1, 128>}, {transform_indices = @transform_3, window_bounds = array<i64: 16, 128>}]} {
    %c0 = arith.constant 0 : index
    %c0_0 = arith.constant 0 : index
    %0 = vector.load %arg3[%c0, %c0_0] : memref<16x32xf32, #tpu.memory_space<vmem>>, vector<16x32xf32>
    %c0_1 = arith.constant 0 : index
    %c0_2 = arith.constant 0 : index
    %1 = vector.load %arg4[%c0_1, %c0_2] : memref<32x128xf32, #tpu.memory_space<vmem>>, vector<32x128xf32>
    %cst = arith.constant dense<0.000000e+00> : vector<16x128xf32>
    %2 = tpu.matmul %0, %1, %cst {dimension_numbers = #tpu.dot_dimension_numbers<[1], [0], [0], [1], [0, 0, 1, 1], [], []>} : vector<16x32xf32>, vector<32x128xf32>, vector<16x128xf32> -> vector<16x128xf32>
    %c0_3 = arith.constant 0 : index
    %c0_4 = arith.constant 0 : index
    %3 = vector.load %arg5[%c0_3, %c0_4] : memref<1x128xf32, #tpu.memory_space<vmem>>, vector<1x128xf32>
    %4 = vector.broadcast %3 : vector<1x128xf32> to vector<16x128xf32>
    %5 = arith.addf %2, %4 : vector<16x128xf32>
    %cst_5 = arith.constant 0.000000e+00 : f32
    %6 = vector.broadcast %cst_5 : f32 to vector<16x128xf32>
    %7 = arith.cmpf ogt, %5, %6 : vector<16x128xf32>
    %cst_6 = arith.constant 2.000000e-01 : f32
    %8 = vector.broadcast %cst_6 : f32 to vector<16x128xf32>
    %9 = arith.mulf %8, %5 : vector<16x128xf32>
    %10 = arith.select %7, %5, %9 : vector<16x128xi1>, vector<16x128xf32>
    %c0_7 = arith.constant 0 : index
    %c0_8 = arith.constant 0 : index
    %11 = vector.load %arg6[%c0_7, %c0_8] : memref<16x128xf32, #tpu.memory_space<vmem>>, vector<16x128xf32>
    tpu.vector_store %arg6[%c0_7, %c0_8], %10 {strides = array<i32>} : memref<16x128xf32, #tpu.memory_space<vmem>>, vector<16x128xf32>,
    return
  }
  func.func @transform_0(%arg0: i32, %arg1: i32, %arg2: memref<1xi32, #tpu.memory_space<smem>>) -> (i32, i32) {
    %c0_i32 = arith.constant 0 : i32
    %c0_i32_0 = arith.constant 0 : i32
    return %arg1, %c0_i32 : i32, i32
  }
  func.func @transform_1(%arg0: i32, %arg1: i32, %arg2: memref<1xi32, #tpu.memory_space<smem>>) -> (i32, i32) {
    %c0_i32 = arith.constant 0 : i32
    %c0_i32_0 = arith.constant 0 : i32
    return %c0_i32, %arg0 : i32, i32
  }
  func.func @transform_2(%arg0: i32, %arg1: i32, %arg2: memref<1xi32, #tpu.memory_space<smem>>) -> (i32, i32) {
    %c0_i32 = arith.constant 0 : i32
    %c0_i32_0 = arith.constant 0 : i32
    return %c0_i32, %arg0 : i32, i32
  }
  func.func @transform_3(%arg0: i32, %arg1: i32, %arg2: memref<1xi32, #tpu.memory_space<smem>>) -> (i32, i32) {
    %c0_i32 = arith.constant 0 : i32
    return %arg1, %arg0 : i32, i32
  }
}

</mosaic_0001>

<llo_original>
// kernel: tpu_custom_call.1
$region0: #{tpu_custom_call.1}
  #allocation0 [shape = 'u32[]', space=smem, size = 0x4, offset = 0x4, fixed_abs, tag = 'smem constant byte address 0x4 - core index']
  #allocation1 [shape = 'u32[72,128]{1,0:T(1,128)}', space=vmem, size = 0x9000, scoped, tag = 'internal scratch']
  #allocation2 [shape = 's32[1]{0}', space=sflag, size = 0x4, scoped, tag = 'scoped memory for tpu_custom_call.1']
  #allocation3 [shape = 's32[1]{0:T(128)S(6)}', space=smem, size = 0x200, scoped, tag = 'prefetched SMEM operand 0']
  %s0 = inlined_call_operand.<no memory space> [shape: s32[1], index: 0, kind: input, shape index: {}]
  %s1 = inlined_call_operand.hbm [shape: f32[8,32], index: 1, kind: input, shape index: {}]
  %s2 = inlined_call_operand.hbm [shape: f32[32,128], index: 2, kind: input, shape index: {}]
  %s3 = inlined_call_operand.vmem [shape: f32[1,128], index: 3, kind: input, shape index: {}]
  %s4 = inlined_call_operand.hbm [shape: f32[8,128], index: 4, kind: output, shape index: {}]
  %s5 = sld [smem:[#allocation0]]
  $region30: #{tpu_custom_call.1} parent=0
    _
  %s7 = ssub.s32 1, %s5
  %s8 = scalar_select 0, %s7, %s5
  %9 = sst [smem:[#allocation3]] %s0
  $region1: #{tpu_custom_call.1} parent=0
    #allocation4 [shape = 'u8[8192]{0}', space=vmem, size = 0x2000, scoped, tag = 'input window, operand 1, single buffered']
    #allocation5 [shape = 's32[1]{0}', space=sflag, size = 0x4, scoped, tag = 'scoped memory for tpu_custom_call.1']
    #allocation6 [shape = 's32[1]{0}', space=sflag, size = 0x4, scoped, tag = 'scoped memory for tpu_custom_call.1']
    #allocation7 [shape = 'u8[16384]{0}', space=vmem, size = 0x4000, scoped, tag = 'input window, operand 2, single buffered']
    #allocation8 [shape = 's32[1]{0}', space=sflag, size = 0x4, scoped, tag = 'scoped memory for tpu_custom_call.1']
    #allocation9 [shape = 'u8[8192]{0}', space=vmem, size = 0x2000, scoped, tag = 'output window, operand 0, single buffered']
    %10 = vsyncpa [#allocation5], 0
    %11 = vsyncpa [#allocation8], 0
    %12 = vsyncpa [#allocation6], 0
    // Predicated region
    $region2: #{tpu_custom_call.1} parent=1 // pred_check
      _
    $region3: #{tpu_custom_call.1} parent=1 // pred_check_branch
      %14 = sbr.rel (0) target = $region5
    $region4: #{tpu_custom_call.1} parent=1 // pred_region
      %16 = vsyncadd [#allocation5], 128
      %s17 = sshll.u32 %s1, 4
      %s18 = int_to_ptr.hbm [resolvable:$true] %s17
      %s19 = sshll.u32 [#allocation4], 4
      %s20 = int_to_ptr.vmem [resolvable:$true] %s19
      %25 = dma.hbm_to_vmem [thread:$0]  %s18, 128, %s20, [#allocation5], 128, 128, 8
    $region5: #{tpu_custom_call.1} parent=1 // pred_fallthru
      _
    // Predicated region
    $region6: #{tpu_custom_call.1} parent=1 // pred_check
      _
    $region7: #{tpu_custom_call.1} parent=1 // pred_check_branch
      %27 = sbr.rel (0) target = $region9
    $region8: #{tpu_custom_call.1} parent=1 // pred_region
      %29 = vsyncadd [#allocation8], 0
      %s30 = sshll.u32 %s2, 4
      %s31 = int_to_ptr.hbm [resolvable:$true] %s30
      %s32 = sshll.u32 [#allocation7], 4
      %s33 = int_to_ptr.vmem [resolvable:$true] %s32
      %38 = dma.hbm_to_vmem [thread:$0]  %s31, 512, %s33, [#allocation8], 128, 128, 8
    $region9: #{tpu_custom_call.1} parent=1 // pred_fallthru
      _
    // Predicated region
    $region10: #{tpu_custom_call.1} parent=1 // pred_check
      _
    $region11: #{tpu_custom_call.1} parent=1 // pred_check_branch
      %40 = sbr.rel (0) target = $region13
    $region12: #{tpu_custom_call.1} parent=1 // pred_region
      _
    $region13: #{tpu_custom_call.1} parent=1 // pred_fallthru
      _
    // Predicated region
    $region14: #{tpu_custom_call.1} parent=1 // pred_check
      _
    $region15: #{tpu_custom_call.1} parent=1 // pred_check_branch
      %42 = sbr.rel (0) target = $region17
    $region16: #{tpu_custom_call.1} parent=1 // pred_region
      %44 = dma.done [#allocation5], 256
    $region17: #{tpu_custom_call.1} parent=1 // pred_fallthru
      _
    // Predicated region
    $region18: #{tpu_custom_call.1} parent=1 // pred_check
      _
    $region19: #{tpu_custom_call.1} parent=1 // pred_check_branch
      %46 = sbr.rel (0) target = $region21
    $region20: #{tpu_custom_call.1} parent=1 // pred_region
      %48 = dma.done [#allocation8], 512
    $region21: #{tpu_custom_call.1} parent=1 // pred_fallthru
      _
    %v49 = vld [vmem:[#allocation4] sm:$0xff]
    %v50 = vld [vmem:[#allocation4 + $0x8] sm:$0xff]
    %v51 = vld [vmem:[#allocation7] sm:$0xff]
    %v52 = vld [vmem:[#allocation7 + $0x8] sm:$0xff]
    %v53 = vld [vmem:[#allocation7 + $0x10] sm:$0xff]
    %v54 = vld [vmem:[#allocation7 + $0x18] sm:$0xff]
    %v55 = vld [vmem:[%s3] sm:$0x1]
    %v57 = vperm.slane %v55, 0
    %vm59 = vcmask 261120
    %v61 = vsel %vm59, %v49, 0
    %v64 = vsel %vm59, %v50, 0
    %66 = vmatpush.msra.mxu0 0.0
    %67 = vmatpush.msra.mxu0 0.0
    %68 = vmatpush.msra.mxu0 0.0
    %69 = vmatpush.msra.mxu0 0.0
    %70 = vmatpush.msra.mxu0 0.0
    %71 = vmatpush.msra.mxu0 0.0
    %72 = vmatpush.msra.mxu0 0.0
    %73 = vmatpush.msra.mxu0 0.0
    %74 = vmatpush.msra.mxu0 0.0
    %75 = vmatpush.msra.mxu0 0.0
    %76 = vmatpush.msra.mxu0 0.0
    %77 = vmatpush.msra.mxu0 0.0
    %78 = vmatpush.msra.mxu0 %v54
    %79 = vmatpush.msra.mxu0 %v53
    %80 = vmatpush.msra.mxu0 %v52
    %81 = vmatpush.msra.mxu0 %v51
    %82 = vmatmul.f32.gmra.mxu0 %v61
    %v83 = vpop.f32.mrf.mxu0
    %v84 = vadd.f32 %v57, %v83
    %85 = vmatmul.f32.gmra.mxu0 %v64
    %v86 = vpop.f32.mrf.mxu0
    %v87 = vadd.f32 %v57, %v86
    %88 = vdwg.mxu0
    %vm89 = vcmp.gt.f32.partialorder %v84, 0.0
    %vm90 = vcmp.gt.f32.partialorder %v87, 0.0
    %v91 = vmul.f32 %v84, 0.2
    %v92 = vmul.f32 %v87, 0.2
    %v93 = vsel %vm89, %v84, %v91
    %v94 = vsel %vm90, %v87, %v92
    %95 = vst [vmem:[#allocation9] sm:$0xff] %v93
    %96 = vst [vmem:[#allocation9 + $0x8] sm:$0xff] %v94
    // Predicated region
    $region22: #{tpu_custom_call.1} parent=1 // pred_check
      _
    $region23: #{tpu_custom_call.1} parent=1 // pred_check_branch
      %98 = sbr.rel (0) target = $region25
    $region24: #{tpu_custom_call.1} parent=1 // pred_region
      %100 = vsyncadd [#allocation6], 128
      %s101 = sshll.u32 [#allocation9], 4
      %s102 = int_to_ptr.vmem [resolvable:$true] %s101
      %s103 = sshll.u32 %s4, 4
      %s104 = int_to_ptr.hbm [resolvable:$true] %s103
      %109 = dma.vmem_to_hbm [thread:$0]  %s102, 128, %s104, [#allocation6], 128, 128, 8
    $region25: #{tpu_custom_call.1} parent=1 // pred_fallthru
      _
    // Predicated region
    $region26: #{tpu_custom_call.1} parent=1 // pred_check
      _
    $region27: #{tpu_custom_call.1} parent=1 // pred_check_branch
      %111 = sbr.rel (0) target = $region29
    $region28: #{tpu_custom_call.1} parent=1 // pred_region
      %113 = dma.done [#allocation6], 256
    $region29: #{tpu_custom_call.1} parent=1 // pred_fallthru
      _
    %114 = vsyncpa [#allocation5], 1
    %115 = vsyncpa [#allocation8], 1
    %116 = vsyncpa [#allocation6], 1

</llo_original>
